<compile_context>
chip_gen: v5e
topology: v5e:2x2
jax: 0.10.0
libtpu: 0.0.40
codegen_flags: <defaults>
</compile_context>

<pallas_src>
import jax
import jax.numpy as jnp
from jax.experimental import pallas as pl
from jax.experimental.pallas import tpu as pltpu


# ----------------------------- kernel ---------------------------------------

def _gate_mul_kernel(x_ref, g_ref, o_ref):
    # x_ref: (TILE_R, TILE_C); g_ref: (1, TILE_C) [2D path, lane-aligned gate]
    # or (TILE_R, 1) [4D path, sublane-aligned gate].  jnp broadcasting covers
    # both; a single VPU multiply per vreg.
    o_ref[...] = x_ref[...] * g_ref[...]


# ----------------------------- tiling helper --------------------------------

# ~1 MiB per block: with in+out double-buffered (~4 MiB resident + tiny gate)
# we stay far below the 16 MiB scoped VMEM default on v5e, the 32 MiB default
# on v6e/v7x, and v7x's 64 MiB physical VMEM, while each block is big enough
# to amortize the ~0.35 us per-grid-step overhead.
_TARGET_BLOCK_BYTES = 1 << 20


def _choose_tiles(rows, cols, itemsize):
    """Pick (tile_r, tile_c) for a row-major (rows, cols) streaming multiply."""
    sub = max(8, 32 // itemsize)  # sublane quantum: 8 f32 / 16 bf16 / 32 int8
    # Lane (last-dim) tile: keep the full extent unless it is 128-divisible and
    # a single sublane-group of it already exceeds the byte budget.
    if cols % 128 == 0 and cols * sub * itemsize > _TARGET_BLOCK_BYTES:
        tile_c = max(128, (_TARGET_BLOCK_BYTES // (sub * itemsize)) // 128 * 128)
        tile_c = min(tile_c, cols)
    else:
        tile_c = cols
    # Sublane (second-last) tile: multiple of `sub`, sized to the byte budget.
    if rows <= sub:
        tile_r = rows  # equals the full dim -> always a legal block shape
    else:
        tile_r = max(sub,
                     (_TARGET_BLOCK_BYTES // max(1, tile_c * itemsize)) // sub * sub)
        tile_r = min(tile_r, ((rows + sub - 1) // sub) * sub)
    return tile_r, tile_c


def _run_gated_2d(x2, g2, gate_block, gate_index_map):
    """Shared pallas_call for a (rows, cols) * broadcast-gate multiply."""
    rows, cols = x2.shape
    itemsize = jnp.dtype(x2.dtype).itemsize
    tile_r, tile_c = _choose_tiles(rows, cols, itemsize)
    grid = (pl.cdiv(rows, tile_r), pl.cdiv(cols, tile_c))
    return pl.pallas_call(
        _gate_mul_kernel,
        out_shape=jax.ShapeDtypeStruct((rows, cols), x2.dtype),
        grid_spec=pltpu.PrefetchScalarGridSpec(
            num_scalar_prefetch=0,
            grid=grid,
            in_specs=[
                pl.BlockSpec((tile_r, tile_c), lambda i, j: (i, j)),
                pl.BlockSpec(gate_block(tile_r, tile_c), gate_index_map),
            ],
            out_specs=pl.BlockSpec((tile_r, tile_c), lambda i, j: (i, j)),
        ),
        compiler_params=pltpu.CompilerParams(
            dimension_semantics=("parallel", "parallel")),
    )(x2, g2)


# ----------------------------- wrapper --------------------------------------

def virtual_gate_forward(x, gate_f):
    """virtual_gate.forward: x of rank 2 (N, C) or rank 4 (N, C, H, W),
    gate_f of shape (C,) (== width)."""
    # Note: gate is cast to x.dtype (PyTorch would promote a bf16 input to f32
    # against its f32 gate; identical for the f32 case exercised here).
    if x.ndim == 2:
        n, c = x.shape
        g = gate_f.reshape(1, c).astype(x.dtype)
        # gate block (1, TILE_C), constant over the row axis of the grid.
        return _run_gated_2d(
            x, g,
            gate_block=lambda tr, tc: (1, tc),
            gate_index_map=lambda i, j: (0, j),
        )

    elif x.ndim == 4:
        n, c, h, w = x.shape
        rows, cols = n * c, h * w
        # Fold (N, C) onto sublanes and (H, W) onto lanes: full sublane
        # occupancy and lane-dense stores even when C is tiny (e.g. 4).
        x2 = x.reshape(rows, cols)
        # Per-row gate column: row r = b*C + ch  ->  gate[ch]  ->  tile over N.
        gcol = jnp.tile(gate_f.astype(x.dtype), n).reshape(rows, 1)
        out2 = _run_gated_2d(
            x2, gcol,
            gate_block=lambda tr, tc: (tr, 1),
            gate_index_map=lambda i, j: (i, 0),
        )
        return out2.reshape(n, c, h, w)

    else:
        raise ValueError("virtual_gate only supports rank-2 or rank-4 inputs")


# ----------------------------- driver ---------------------------------------

if __name__ == "__main__":
    key = jax.random.PRNGKey(0)
    k2d, k4d = jax.random.split(key)

    width = 4  # channel count C

    # __init__: gate_f = ones(width); emulate set_structure_value with a
    # deterministic non-trivial gate so the broadcast is actually exercised.
    gate_f = jnp.ones((width,), dtype=jnp.float32)
    gate_f = (jnp.arange(width, dtype=jnp.float32) + 1.0) / width

    # ---- 2D path: (N, C) ----
    x2 = jax.random.normal(k2d, (2, width), dtype=jnp.float32)
    out2 = jax.block_until_ready(virtual_gate_forward(x2, gate_f))
    ref2 = gate_f[None, :] * x2
    assert out2.shape == x2.shape
    assert jnp.allclose(out2, ref2, atol=1e-6), "2D mismatch"

    # ---- 4D path: (N, C, H, W) ----
    x4 = jax.random.normal(k4d, (2, width, 16, 16), dtype=jnp.float32)
    out4 = jax.block_until_ready(virtual_gate_forward(x4, gate_f))
    ref4 = gate_f[None, :, None, None] * x4
    assert out4.shape == x4.shape
    assert jnp.allclose(out4, ref4, atol=1e-6), "4D mismatch"

    print("KERNEL_OK")
</pallas_src>

<mosaic_0001>
module attributes {stable_mosaic.version = 11 : i64} {
  func.func @_gate_mul_kernel(%arg0: i32, %arg1: i32, %arg2: memref<2x4xf32, #tpu.memory_space<vmem>>, %arg3: memref<1x4xf32, #tpu.memory_space<vmem>>, %arg4: memref<2x4xf32, #tpu.memory_space<vmem>>) attributes {dimension_semantics = [#tpu.dimension_semantics<parallel>, #tpu.dimension_semantics<parallel>], iteration_bounds = array<i64: 1, 1>, scalar_prefetch = 0 : i64, scratch_operands = 0 : i64, tpu.core_type = #tpu.core_type<tc>, window_params = [{transform_indices = @transform_0, window_bounds = array<i64: 2, 4>}, {transform_indices = @transform_1, window_bounds = array<i64: 1, 4>}, {transform_indices = @transform_2, window_bounds = array<i64: 2, 4>}]} {
    %c0 = arith.constant 0 : index
    %c0_0 = arith.constant 0 : index
    %0 = vector.load %arg2[%c0, %c0_0] : memref<2x4xf32, #tpu.memory_space<vmem>>, vector<2x4xf32>
    %c0_1 = arith.constant 0 : index
    %c0_2 = arith.constant 0 : index
    %1 = vector.load %arg3[%c0_1, %c0_2] : memref<1x4xf32, #tpu.memory_space<vmem>>, vector<1x4xf32>
    %2 = vector.broadcast %1 : vector<1x4xf32> to vector<2x4xf32>
    %3 = arith.mulf %0, %2 : vector<2x4xf32>
    %c0_3 = arith.constant 0 : index
    %c0_4 = arith.constant 0 : index
    %4 = vector.load %arg4[%c0_3, %c0_4] : memref<2x4xf32, #tpu.memory_space<vmem>>, vector<2x4xf32>
    tpu.vector_store %arg4[%c0_3, %c0_4], %3 {strides = array<i32>} : memref<2x4xf32, #tpu.memory_space<vmem>>, vector<2x4xf32>,
    return
  }
  func.func @transform_0(%arg0: i32, %arg1: i32) -> (i32, i32) {
    %c0_i32 = arith.constant 0 : i32
    return %arg0, %arg1 : i32, i32
  }
  func.func @transform_1(%arg0: i32, %arg1: i32) -> (i32, i32) {
    %c0_i32 = arith.constant 0 : i32
    %c0_i32_0 = arith.constant 0 : i32
    return %c0_i32, %arg1 : i32, i32
  }
  func.func @transform_2(%arg0: i32, %arg1: i32) -> (i32, i32) {
    %c0_i32 = arith.constant 0 : i32
    return %arg0, %arg1 : i32, i32
  }
}

</mosaic_0001>

<llo_original>
// kernel: tpu_custom_call.1
$region0: #{tpu_custom_call.1}
  #allocation0 [shape = 'u32[]', space=smem, size = 0x4, offset = 0x4, fixed_abs, tag = 'smem constant byte address 0x4 - core index']
  #allocation1 [shape = 'u32[72,128]{1,0:T(1,128)}', space=vmem, size = 0x9000, scoped, tag = 'internal scratch']
  %s0 = inlined_call_operand.hbm [shape: f32[2,4], index: 0, kind: input, shape index: {}]
  %s1 = inlined_call_operand.hbm [shape: f32[1,4], index: 1, kind: input, shape index: {}]
  %s2 = inlined_call_operand.hbm [shape: f32[2,4], index: 2, kind: output, shape index: {}]
  %s3 = sld [smem:[#allocation0]]
  $region26: #{tpu_custom_call.1} parent=0
    _
  %s5 = ssub.s32 1, %s3
  %s6 = scalar_select 0, %s5, %s3
  $region1: #{tpu_custom_call.1} parent=0
    #allocation2 [shape = 'u8[1024]{0}', space=vmem, size = 0x400, scoped, tag = 'input window, operand 0, single buffered']
    #allocation3 [shape = 's32[1]{0}', space=sflag, size = 0x4, scoped, tag = 'scoped memory for tpu_custom_call.1']
    #allocation4 [shape = 's32[1]{0}', space=sflag, size = 0x4, scoped, tag = 'scoped memory for tpu_custom_call.1']
    #allocation5 [shape = 'u8[512]{0}', space=vmem, size = 0x400, scoped, tag = 'input window, operand 1, single buffered']
    #allocation6 [shape = 's32[1]{0}', space=sflag, size = 0x4, scoped, tag = 'scoped memory for tpu_custom_call.1']
    #allocation7 [shape = 'u8[1024]{0}', space=vmem, size = 0x400, scoped, tag = 'output window, operand 0, single buffered']
    %7 = vsyncpa [#allocation3], 0
    %8 = vsyncpa [#allocation6], 0
    %9 = vsyncpa [#allocation4], 0
    // Predicated region
    $region2: #{tpu_custom_call.1} parent=1 // pred_check
      _
    $region3: #{tpu_custom_call.1} parent=1 // pred_check_branch
      %11 = sbr.rel (0) target = $region5
    $region4: #{tpu_custom_call.1} parent=1 // pred_region
      %13 = vsyncadd [#allocation3], 0
      %s15 = sshll.u32 %s0, 4
      %s16 = int_to_ptr.hbm [resolvable:$true] %s15
      %s17 = sshll.u32 [#allocation2], 4
      %s18 = int_to_ptr.vmem [resolvable:$true] %s17
      %20 = dma.hbm_to_vmem [thread:$0]  %s16, 32, %s18, [#allocation3]
    $region5: #{tpu_custom_call.1} parent=1 // pred_fallthru
      _
    // Predicated region
    $region6: #{tpu_custom_call.1} parent=1 // pred_check
      _
    $region7: #{tpu_custom_call.1} parent=1 // pred_check_branch
      %22 = sbr.rel (0) target = $region9
    $region8: #{tpu_custom_call.1} parent=1 // pred_region
      %24 = vsyncadd [#allocation6], 0
      %s26 = sshll.u32 %s1, 4
      %s27 = int_to_ptr.hbm [resolvable:$true] %s26
      %s28 = sshll.u32 [#allocation5], 4
      %s29 = int_to_ptr.vmem [resolvable:$true] %s28
      %31 = dma.hbm_to_vmem [thread:$0]  %s27, 16, %s29, [#allocation6]
    $region9: #{tpu_custom_call.1} parent=1 // pred_fallthru
      _
    // Predicated region
    $region10: #{tpu_custom_call.1} parent=1 // pred_check
      _
    $region11: #{tpu_custom_call.1} parent=1 // pred_check_branch
      %33 = sbr.rel (0) target = $region13
    $region12: #{tpu_custom_call.1} parent=1 // pred_region
      %35 = dma.done [#allocation3], 32
    $region13: #{tpu_custom_call.1} parent=1 // pred_fallthru
      _
    // Predicated region
    $region14: #{tpu_custom_call.1} parent=1 // pred_check
      _
    $region15: #{tpu_custom_call.1} parent=1 // pred_check_branch
      %37 = sbr.rel (0) target = $region17
    $region16: #{tpu_custom_call.1} parent=1 // pred_region
      %39 = dma.done [#allocation6], 16
    $region17: #{tpu_custom_call.1} parent=1 // pred_fallthru
      _
    %v40 = vld [vmem:[#allocation2] sm:$0x3]
    %v41 = vld [vmem:[#allocation5] sm:$0x1]
    %v43 = vperm.slane %v41, 0
    %v45 = vmul.f32 %v40, %v43
    %vm46 = vcmask 25600
    %47 = vst.msk [vmem:[#allocation7] sm:$0x3] %vm46, %v45
    // Predicated region
    $region18: #{tpu_custom_call.1} parent=1 // pred_check
      _
    $region19: #{tpu_custom_call.1} parent=1 // pred_check_branch
      %49 = sbr.rel (0) target = $region21
    $region20: #{tpu_custom_call.1} parent=1 // pred_region
      %51 = vsyncadd [#allocation4], 0
      %s53 = sshll.u32 [#allocation7], 4
      %s54 = int_to_ptr.vmem [resolvable:$true] %s53
      %s55 = sshll.u32 %s2, 4
      %s56 = int_to_ptr.hbm [resolvable:$true] %s55
      %58 = dma.vmem_to_hbm [thread:$0]  %s54, 32, %s56, [#allocation4]
    $region21: #{tpu_custom_call.1} parent=1 // pred_fallthru
      _
    // Predicated region
    $region22: #{tpu_custom_call.1} parent=1 // pred_check
      _
    $region23: #{tpu_custom_call.1} parent=1 // pred_check_branch
      %60 = sbr.rel (0) target = $region25
    $region24: #{tpu_custom_call.1} parent=1 // pred_region
      %62 = dma.done [#allocation4], 32
    $region25: #{tpu_custom_call.1} parent=1 // pred_fallthru
      _
    %63 = vsyncpa [#allocation3], 1
    %64 = vsyncpa [#allocation6], 1
    %65 = vsyncpa [#allocation4], 1

</llo_original>
